<compile_context>
chip_gen: v6e
topology: v6e:2x2x1
jax: 0.10.0
libtpu: 0.0.40
codegen_flags: <defaults>
</compile_context>

<pallas_src>
import jax
import jax.numpy as jnp
from jax.experimental import pallas as pl
from jax.experimental.pallas import tpu as pltpu


def _sact_kernel(x_ref, xs_ref, noise_ref, mask_ref, yx_ref, ys_ref):
    # x/xs/yx/ys: (TILE_R, TILE_C); noise/mask: (S, TILE_C).
    # Primary layout: S == TILE_R -> elementwise.  Fallback: S == 1 ->
    # broadcast over the batch rows.  Pure VPU work, no MXU.
    noise = noise_ref[...]
    mask = mask_ref[...]
    yx_ref[...] = ((x_ref[...] + noise) * mask).astype(yx_ref.dtype)
    ys_ref[...] = (xs_ref[...] * mask).astype(ys_ref.dtype)


def _vmem_capacity_bytes(default=64 << 20):
    """Physical VMEM per TensorCore; conservative (v7x) default if unknown."""
    try:
        cap = getattr(pltpu.get_tpu_info(), "vmem_capacity_bytes", None)
        if cap:
            return int(cap)
    except Exception:
        pass
    return default


def _min_sublanes(itemsize):
    if itemsize >= 4:
        return 8
    if itemsize == 2:
        return 16
    return 32


def sact_forward(x, xS, noise, mask):
    """x, xS: (N, *size); noise, mask: size. Returns (y, yS) with input shapes."""
    N = x.shape[0]
    F = 1
    for d in x.shape[1:]:
        F *= d
    itemsize = jnp.dtype(x.dtype).itemsize
    min_sub = _min_sublanes(itemsize)

    # ---- VMEM budgeting (generation-aware) --------------------------------
    vmem_cap = _vmem_capacity_bytes()                 # 64 MiB v7x, 128 MiB v5e/v6e
    vmem_limit = min((vmem_cap * 3) // 4, 64 << 20)   # 48 MiB v7x, 64 MiB v5e/v6e
    # 6 arrays (x, xS, noise, mask, y, yS) double-buffered -> ~12 live blocks;
    # divide by 14 for compiler headroom, cap at 4 MiB per block.
    block_cap = max(128 * 128 * itemsize, min(4 << 20, vmem_limit // 14))

    # ---- layout -----------------------------------------------------------
    if F % min_sub == 0:
        # Primary: feature axis -> (S sublanes, F//S lanes); lane tile is a
        # multiple of 128 up to the per-block budget (pl.cdiv masks the tail).
        S = min_sub
        cols = F // S
        rows = N * S
        tile_r = S
        max_lanes = max(128, (block_cap // (S * itemsize)) // 128 * 128)
        tile_c = cols if cols <= max_lanes else max_lanes
    else:
        # Fallback: odd feature count.  Keep the natural (N, F) view but tile
        # the batch rows in bounded chunks (multiple of 8) so large N never
        # exceeds the VMEM budget.  cols < 128 falls back to masked stores.
        S = 1
        cols = F
        rows = N
        tile_c = cols
        row_budget = max(1, block_cap // max(1, cols * itemsize))
        if N <= row_budget:
            tile_r = N
        else:
            tile_r = max(8, (row_budget // 8) * 8)

    row_blocks = pl.cdiv(rows, tile_r)
    lane_blocks = pl.cdiv(cols, tile_c)

    x2 = x.reshape(rows, cols)
    xS2 = xS.reshape(rows, cols)
    # NOTE: parameters are applied in the activation dtype.  If x is bf16 and
    # the PyTorch module keeps fp32 params this differs slightly from applying
    # fp32 params to bf16 activations (documented, acceptable).
    n2 = noise.reshape(S, cols).astype(x.dtype)
    m2 = mask.reshape(S, cols).astype(x.dtype)

    # Grid order: batch/row axis innermost when the lane axis is split, so the
    # param block index (0, j) is constant across consecutive steps and the
    # params are DMA'd exactly once per lane block (total 2*F*itemsize bytes).
    if lane_blocks >= 2:
        grid = (lane_blocks, row_blocks)
        data_spec = pl.BlockSpec((tile_r, tile_c), lambda j, i: (i, j))
        param_spec = pl.BlockSpec((S, tile_c), lambda j, i: (0, j))
    else:
        # Single lane block: params are resident regardless; lead with the row
        # axis so v7x's two TensorCores both get work when row_blocks >= 2.
        grid = (row_blocks, lane_blocks)
        data_spec = pl.BlockSpec((tile_r, tile_c), lambda i, j: (i, j))
        param_spec = pl.BlockSpec((S, tile_c), lambda i, j: (0, j))

    y, yS = pl.pallas_call(
        _sact_kernel,
        out_shape=(
            jax.ShapeDtypeStruct((rows, cols), x.dtype),
            jax.ShapeDtypeStruct((rows, cols), xS.dtype),
        ),
        grid_spec=pltpu.PrefetchScalarGridSpec(
            num_scalar_prefetch=0,
            grid=grid,
            in_specs=[data_spec, data_spec, param_spec, param_spec],
            out_specs=[data_spec, data_spec],
        ),
        compiler_params=pltpu.CompilerParams(
            dimension_semantics=("parallel", "parallel"),
            vmem_limit_bytes=int(vmem_limit),
        ),
    )(x2, xS2, n2, m2)

    return y.reshape(x.shape), yS.reshape(xS.shape)


if __name__ == "__main__":
    key = jax.random.PRNGKey(0)
    k_x, k_xs, k_noise, k_mask = jax.random.split(key, 4)

    # Primary case: conv-style activations, F = C*H*W divisible by 8.
    N, C, H, W = 2, 4, 16, 16
    size = (C, H, W)

    x = jax.random.normal(k_x, (N, C, H, W), dtype=jnp.float32)
    xS = jax.random.normal(k_xs, (N, C, H, W), dtype=jnp.float32)

    # Deterministic parameter init mimicking SAct.set_noise(var=0.1) and a
    # binary mask (clear_mask would be all-ones; random 0/1 exercises masking).
    noise = jax.random.normal(k_noise, size, dtype=jnp.float32) * 0.1
    mask = (jax.random.uniform(k_mask, size) > 0.25).astype(jnp.float32)

    y, yS = sact_forward(x, xS, noise, mask)
    jax.block_until_ready((y, yS))

    y_ref = (x + noise[None]) * mask[None]
    yS_ref = xS * mask[None]
    assert jnp.allclose(y, y_ref, atol=1e-6, rtol=1e-6)
    assert jnp.allclose(yS, yS_ref, atol=1e-6, rtol=1e-6)

    # Fallback layout: feature size not a multiple of the sublane factor.
    size_b = (3, 5, 7)
    x_b = jax.random.normal(k_x, (2,) + size_b, dtype=jnp.float32)
    xS_b = jax.random.normal(k_xs, (2,) + size_b, dtype=jnp.float32)
    noise_b = jax.random.normal(k_noise, size_b, dtype=jnp.float32) * 0.1
    mask_b = (jax.random.uniform(k_mask, size_b) > 0.25).astype(jnp.float32)

    y_b, yS_b = sact_forward(x_b, xS_b, noise_b, mask_b)
    jax.block_until_ready((y_b, yS_b))
    assert jnp.allclose(y_b, (x_b + noise_b[None]) * mask_b[None], atol=1e-6, rtol=1e-6)
    assert jnp.allclose(yS_b, xS_b * mask_b[None], atol=1e-6, rtol=1e-6)

    # bf16 path: exercises the 16-sublane packed layout (params cast to bf16).
    x_h = x.astype(jnp.bfloat16)
    xS_h = xS.astype(jnp.bfloat16)
    y_h, yS_h = sact_forward(x_h, xS_h, noise, mask)
    jax.block_until_ready((y_h, yS_h))
    n_h = noise.astype(jnp.bfloat16)[None]
    m_h = mask.astype(jnp.bfloat16)[None]
    assert jnp.allclose(y_h.astype(jnp.float32),
                        ((x_h + n_h) * m_h).astype(jnp.float32), atol=1e-5)
    assert jnp.allclose(yS_h.astype(jnp.float32),
                        (xS_h * m_h).astype(jnp.float32), atol=1e-5)

    print("KERNEL_OK")
</pallas_src>

<mosaic_0001>
module attributes {stable_mosaic.version = 11 : i64} {
  func.func @_sact_kernel(%arg0: i32, %arg1: i32, %arg2: memref<8x128xf32, #tpu.memory_space<vmem>>, %arg3: memref<8x128xf32, #tpu.memory_space<vmem>>, %arg4: memref<8x128xf32, #tpu.memory_space<vmem>>, %arg5: memref<8x128xf32, #tpu.memory_space<vmem>>, %arg6: memref<8x128xf32, #tpu.memory_space<vmem>>, %arg7: memref<8x128xf32, #tpu.memory_space<vmem>>) attributes {dimension_semantics = [#tpu.dimension_semantics<parallel>, #tpu.dimension_semantics<parallel>], iteration_bounds = array<i64: 2, 1>, scalar_prefetch = 0 : i64, scratch_operands = 0 : i64, tpu.core_type = #tpu.core_type<tc>, window_params = [{transform_indices = @transform_0, window_bounds = array<i64: 8, 128>}, {transform_indices = @transform_1, window_bounds = array<i64: 8, 128>}, {transform_indices = @transform_2, window_bounds = array<i64: 8, 128>}, {transform_indices = @transform_3, window_bounds = array<i64: 8, 128>}, {transform_indices = @transform_4, window_bounds = array<i64: 8, 128>}, {transform_indices = @transform_5, window_bounds = array<i64: 8, 128>}]} {
    %c0 = arith.constant 0 : index
    %c0_0 = arith.constant 0 : index
    %0 = vector.load %arg4[%c0, %c0_0] : memref<8x128xf32, #tpu.memory_space<vmem>>, vector<8x128xf32>
    %c0_1 = arith.constant 0 : index
    %c0_2 = arith.constant 0 : index
    %1 = vector.load %arg5[%c0_1, %c0_2] : memref<8x128xf32, #tpu.memory_space<vmem>>, vector<8x128xf32>
    %c0_3 = arith.constant 0 : index
    %c0_4 = arith.constant 0 : index
    %2 = vector.load %arg2[%c0_3, %c0_4] : memref<8x128xf32, #tpu.memory_space<vmem>>, vector<8x128xf32>
    %3 = arith.addf %2, %0 : vector<8x128xf32>
    %4 = arith.mulf %3, %1 : vector<8x128xf32>
    %c0_5 = arith.constant 0 : index
    %c0_6 = arith.constant 0 : index
    %5 = vector.load %arg6[%c0_5, %c0_6] : memref<8x128xf32, #tpu.memory_space<vmem>>, vector<8x128xf32>
    tpu.vector_store %arg6[%c0_5, %c0_6], %4 {strides = array<i32>} : memref<8x128xf32, #tpu.memory_space<vmem>>, vector<8x128xf32>,
    %c0_7 = arith.constant 0 : index
    %c0_8 = arith.constant 0 : index
    %6 = vector.load %arg3[%c0_7, %c0_8] : memref<8x128xf32, #tpu.memory_space<vmem>>, vector<8x128xf32>
    %7 = arith.mulf %6, %1 : vector<8x128xf32>
    %c0_9 = arith.constant 0 : index
    %c0_10 = arith.constant 0 : index
    %8 = vector.load %arg7[%c0_9, %c0_10] : memref<8x128xf32, #tpu.memory_space<vmem>>, vector<8x128xf32>
    tpu.vector_store %arg7[%c0_9, %c0_10], %7 {strides = array<i32>} : memref<8x128xf32, #tpu.memory_space<vmem>>, vector<8x128xf32>,
    return
  }
  func.func @transform_0(%arg0: i32, %arg1: i32) -> (i32, i32) {
    %c0_i32 = arith.constant 0 : i32
    return %arg0, %arg1 : i32, i32
  }
  func.func @transform_1(%arg0: i32, %arg1: i32) -> (i32, i32) {
    %c0_i32 = arith.constant 0 : i32
    return %arg0, %arg1 : i32, i32
  }
  func.func @transform_2(%arg0: i32, %arg1: i32) -> (i32, i32) {
    %c0_i32 = arith.constant 0 : i32
    %c0_i32_0 = arith.constant 0 : i32
    return %c0_i32, %arg1 : i32, i32
  }
  func.func @transform_3(%arg0: i32, %arg1: i32) -> (i32, i32) {
    %c0_i32 = arith.constant 0 : i32
    %c0_i32_0 = arith.constant 0 : i32
    return %c0_i32, %arg1 : i32, i32
  }
  func.func @transform_4(%arg0: i32, %arg1: i32) -> (i32, i32) {
    %c0_i32 = arith.constant 0 : i32
    return %arg0, %arg1 : i32, i32
  }
  func.func @transform_5(%arg0: i32, %arg1: i32) -> (i32, i32) {
    %c0_i32 = arith.constant 0 : i32
    return %arg0, %arg1 : i32, i32
  }
}

</mosaic_0001>

<llo_original>
// kernel: tpu_custom_call.1
$region0: #{tpu_custom_call.1}
  #allocation0 [shape = 'u32[]', space=smem, size = 0x4, offset = 0x4, fixed_abs, tag = 'smem constant byte address 0x4 - core index']
  #allocation1 [shape = 'u32[144,128]{1,0:T(1,128)}', space=vmem, size = 0x12000, scoped, tag = 'internal scratch']
  %s0 = inlined_call_operand.hbm [shape: f32[16,128], index: 0, kind: input, shape index: {}]
  %s1 = inlined_call_operand.hbm [shape: f32[16,128], index: 1, kind: input, shape index: {}]
  %s2 = inlined_call_operand.hbm [shape: f32[8,128], index: 2, kind: input, shape index: {}]
  %s3 = inlined_call_operand.hbm [shape: f32[8,128], index: 3, kind: input, shape index: {}]
  %s4 = inlined_call_operand.hbm [shape: f32[16,128], index: 4, kind: output, shape index: {0}]
  %s5 = inlined_call_operand.hbm [shape: f32[16,128], index: 5, kind: output, shape index: {1}]
  %6 = xla_tuple %s4, %s5
  %s7 = sld [smem:[#allocation0]]
  $region73: #{tpu_custom_call.1} parent=0
    _
  %s9 = ssub.s32 1, %s7
  %s10 = scalar_select 0, %s9, %s7
  $region1: #{tpu_custom_call.1} parent=0
    #allocation2 [shape = 'u8[8192]{0}', space=vmem, size = 0x2000, scoped, tag = 'input window, operand 0']
    #allocation3 [shape = 's32[2]{0}', space=sflag, size = 0x8, scoped, tag = 'scoped memory for tpu_custom_call.1']
    #allocation4 [shape = 's32[2]{0}', space=sflag, size = 0x8, scoped, tag = 'scoped memory for tpu_custom_call.1']
    #allocation5 [shape = 'u8[8192]{0}', space=vmem, size = 0x2000, scoped, tag = 'input window, operand 1']
    #allocation6 [shape = 's32[2]{0}', space=sflag, size = 0x8, scoped, tag = 'scoped memory for tpu_custom_call.1']
    #allocation7 [shape = 'u8[4096]{0}', space=vmem, size = 0x1000, scoped, tag = 'input window, operand 2, single buffered']
    #allocation8 [shape = 'u8[4096]{0}', space=vmem, size = 0x1000, scoped, tag = 'input window, operand 3, single buffered']
    #allocation9 [shape = 's32[1]{0}', space=sflag, size = 0x4, scoped, tag = 'scoped memory for tpu_custom_call.1']
    #allocation10 [shape = 'u8[8192]{0}', space=vmem, size = 0x2000, scoped, tag = 'output window, operand 0']
    #allocation11 [shape = 'u8[8192]{0}', space=vmem, size = 0x2000, scoped, tag = 'output window, operand 1']
    #allocation12 [shape = 's32[2]{0}', space=sflag, size = 0x8, scoped, tag = 'scoped memory for tpu_custom_call.1']
    %11 = vsyncpa [#allocation3], 0
    %s12 = scalar_lea.sflag [#allocation3], 1
    %13 = vsyncpa %s12, 0
    %14 = vsyncpa [#allocation6], 0
    %s15 = scalar_lea.sflag [#allocation6], 1
    %16 = vsyncpa %s15, 0
    %17 = vsyncpa [#allocation9], 0
    %18 = vsyncpa [#allocation4], 0
    %s19 = scalar_lea.sflag [#allocation4], 1
    %20 = vsyncpa %s19, 0
    %21 = vsyncpa [#allocation12], 0
    %s22 = scalar_lea.sflag [#allocation12], 1
    %23 = vsyncpa %s22, 0
    loop: start=0, step=1, limit=4
    $region2: #{tpu_custom_call.1} parent=1 // loop_pre_header
      _
    $region3: #{tpu_custom_call.1} parent=1 // loop_header
      %s25 = sphi 0, %s29
      %p26 = scmp.ge.s32.totalorder %s25, 4
      %s32 = sphi 0, %s44
      %s33 = sphi 0, %s40
      %s34 = sphi 0, %s32
      %s35 = sphi 0, %s33
      %s36 = sphi 0, %s34
      %s37 = sphi 0, %s35
      %s49 = sphi 0, %s51
      %s52 = sphi 0, %s49
      %s53 = sphi 0, %s52
      %s69 = sphi 0, %s53
      %s77 = sphi 0, %s79
      %s80 = sphi 0, %s77
      %s81 = sphi 0, %s80
      %s97 = sphi 0, %s81
      %s103 = sphi 0, %s105
      %s106 = sphi 0, %s103
      %s107 = sphi 0, %s106
      %s123 = sphi 0, %s107
      %s129 = sphi 0, %s131
      %s132 = sphi 0, %s129
      %s133 = sphi 0, %s132
      %s149 = sphi 0, %s133
      %s157 = sphi 0, %s159
      %s160 = sphi 0, %s157
      %s161 = sphi 0, %s160
      %s177 = sphi 0, %s161
      %s185 = sphi 0, %s187
      %s188 = sphi 0, %s185
      %s189 = sphi 0, %s188
      %s205 = sphi 0, %s189
    $region4: #{tpu_custom_call.1} parent=1 // loop_header_branch
      %28 = sbr.rel (%p26) target = $region8
    $region5: #{tpu_custom_call.1} parent=1 // loop_body
      %s30 = ssub.s32 %s25, 1
      %s31 = ssub.s32 %s25, 2
      %s38 = sadd.s32 1, %s33
      %p39 = scmp.ge.s32.totalorder %s38, 1
      %s40 = scalar_select %p39, 0, %s38
      %s41 = sadd.s32 1, %s32
      %s42 = scalar_select %p39, %s41, %s32
      %p43 = scmp.ge.s32.totalorder %s42, 2
      %s44 = scalar_select %p43, 0, %s42
      %s45 = ssub.s32 %s32, %s44
      %s46 = ssub.s32 %s33, %s40
      %s47 = sor.u32 %s45, %s46
      %p48 = scmp.eq.s32.totalorder %s47, 0
      %s50 = sadd.s32 %s49, 1
      %s51 = scalar_select %p48, %s49, %s50
      %p54 = pneg %p48
      %p55 = scmp.eq.s32.totalorder %s25, 1
      %p56 = por %p54, %p55
      %p57 = scmp.ne.s32.totalorder %s49, %s52
      %p58 = scmp.eq.s32.totalorder %s25, 0
      %p59 = por %p57, %p58
      %p60 = scmp.ne.s32.totalorder %s49, %s52
      %p61 = scmp.eq.s32.totalorder %s30, 1
      %p62 = por %p60, %p61
      %p63 = scmp.ne.s32.totalorder %s52, %s53
      %p64 = scmp.eq.s32.totalorder %s30, 0
      %p65 = por %p63, %p64
      %p66 = scmp.ne.s32.totalorder %s52, %s53
      %p67 = scmp.eq.s32.totalorder %s31, 1
      %p68 = por %p66, %p67
      %p70 = scmp.ne.s32.totalorder %s53, %s69
      %p71 = scmp.eq.s32.totalorder %s31, 0
      %p72 = por %p70, %p71
      %s73 = ssub.s32 %s32, %s44
      %s74 = ssub.s32 %s33, %s40
      %s75 = sor.u32 %s73, %s74
      %p76 = scmp.eq.s32.totalorder %s75, 0
      %s78 = sadd.s32 %s77, 1
      %s79 = scalar_select %p76, %s77, %s78
      %p82 = pneg %p76
      %p83 = scmp.eq.s32.totalorder %s25, 1
      %p84 = por %p82, %p83
      %p85 = scmp.ne.s32.totalorder %s77, %s80
      %p86 = scmp.eq.s32.totalorder %s25, 0
      %p87 = por %p85, %p86
      %p88 = scmp.ne.s32.totalorder %s77, %s80
      %p89 = scmp.eq.s32.totalorder %s30, 1
      %p90 = por %p88, %p89
      %p91 = scmp.ne.s32.totalorder %s80, %s81
      %p92 = scmp.eq.s32.totalorder %s30, 0
      %p93 = por %p91, %p92
      %p94 = scmp.ne.s32.totalorder %s80, %s81
      %p95 = scmp.eq.s32.totalorder %s31, 1
      %p96 = por %p94, %p95
      %p98 = scmp.ne.s32.totalorder %s81, %s97
      %p99 = scmp.eq.s32.totalorder %s31, 0
      %p100 = por %p98, %p99
      %s101 = ssub.s32 %s33, %s40
      %p102 = scmp.eq.s32.totalorder %s101, 0
      %s104 = sadd.s32 %s103, 1
      %s105 = scalar_select %p102, %s103, %s104
      %p108 = pneg %p102
      %p109 = scmp.eq.s32.totalorder %s25, 1
      %p110 = por %p108, %p109
      %p111 = scmp.ne.s32.totalorder %s103, %s106
      %p112 = scmp.eq.s32.totalorder %s25, 0
      %p113 = por %p111, %p112
      %p114 = scmp.ne.s32.totalorder %s103, %s106
      %p115 = scmp.eq.s32.totalorder %s30, 1
      %p116 = por %p114, %p115
      %p117 = scmp.ne.s32.totalorder %s106, %s107
      %p118 = scmp.eq.s32.totalorder %s30, 0
      %p119 = por %p117, %p118
      %p120 = scmp.ne.s32.totalorder %s106, %s107
      %p121 = scmp.eq.s32.totalorder %s31, 1
      %p122 = por %p120, %p121
      %p124 = scmp.ne.s32.totalorder %s107, %s123
      %p125 = scmp.eq.s32.totalorder %s31, 0
      %p126 = por %p124, %p125
      %s127 = ssub.s32 %s33, %s40
      %p128 = scmp.eq.s32.totalorder %s127, 0
      %s130 = sadd.s32 %s129, 1
      %s131 = scalar_select %p128, %s129, %s130
      %p134 = pneg %p128
      %p135 = scmp.eq.s32.totalorder %s25, 1
      %p136 = por %p134, %p135
      %p137 = scmp.ne.s32.totalorder %s129, %s132
      %p138 = scmp.eq.s32.totalorder %s25, 0
      %p139 = por %p137, %p138
      %p140 = scmp.ne.s32.totalorder %s129, %s132
      %p141 = scmp.eq.s32.totalorder %s30, 1
      %p142 = por %p140, %p141
      %p143 = scmp.ne.s32.totalorder %s132, %s133
      %p144 = scmp.eq.s32.totalorder %s30, 0
      %p145 = por %p143, %p144
      %p146 = scmp.ne.s32.totalorder %s132, %s133
      %p147 = scmp.eq.s32.totalorder %s31, 1
      %p148 = por %p146, %p147
      %p150 = scmp.ne.s32.totalorder %s133, %s149
      %p151 = scmp.eq.s32.totalorder %s31, 0
      %p152 = por %p150, %p151
      %s153 = ssub.s32 %s32, %s44
      %s154 = ssub.s32 %s33, %s40
      %s155 = sor.u32 %s153, %s154
      %p156 = scmp.eq.s32.totalorder %s155, 0
      %s158 = sadd.s32 %s157, 1
      %s159 = scalar_select %p156, %s157, %s158
      %p162 = pneg %p156
      %p163 = scmp.eq.s32.totalorder %s25, 1
      %p164 = por %p162, %p163
      %p165 = scmp.ne.s32.totalorder %s157, %s160
      %p166 = scmp.eq.s32.totalorder %s25, 0
      %p167 = por %p165, %p166
      %p168 = scmp.ne.s32.totalorder %s157, %s160
      %p169 = scmp.eq.s32.totalorder %s30, 1
      %p170 = por %p168, %p169
      %p171 = scmp.ne.s32.totalorder %s160, %s161
      %p172 = scmp.eq.s32.totalorder %s30, 0
      %p173 = por %p171, %p172
      %p174 = scmp.ne.s32.totalorder %s160, %s161
      %p175 = scmp.eq.s32.totalorder %s31, 1
      %p176 = por %p174, %p175
      %p178 = scmp.ne.s32.totalorder %s161, %s177
      %p179 = scmp.eq.s32.totalorder %s31, 0
      %p180 = por %p178, %p179
      %s181 = ssub.s32 %s32, %s44
      %s182 = ssub.s32 %s33, %s40
      %s183 = sor.u32 %s181, %s182
      %p184 = scmp.eq.s32.totalorder %s183, 0
      %s186 = sadd.s32 %s185, 1
      %s187 = scalar_select %p184, %s185, %s186
      %p190 = pneg %p184
      %p191 = scmp.eq.s32.totalorder %s25, 1
      %p192 = por %p190, %p191
      %p193 = scmp.ne.s32.totalorder %s185, %s188
      %p194 = scmp.eq.s32.totalorder %s25, 0
      %p195 = por %p193, %p194
      %p196 = scmp.ne.s32.totalorder %s185, %s188
      %p197 = scmp.eq.s32.totalorder %s30, 1
      %p198 = por %p196, %p197
      %p199 = scmp.ne.s32.totalorder %s188, %s189
      %p200 = scmp.eq.s32.totalorder %s30, 0
      %p201 = por %p199, %p200
      %p202 = scmp.ne.s32.totalorder %s188, %s189
      %p203 = scmp.eq.s32.totalorder %s31, 1
      %p204 = por %p202, %p203
      %p206 = scmp.ne.s32.totalorder %s189, %s205
      %p207 = scmp.eq.s32.totalorder %s31, 0
      %p208 = por %p206, %p207
      %p209 = scmp.le.s32.totalorder 1, %s25
      %p210 = scmp.lt.s32.totalorder %s25, 3
      %p211 = pnand %p209, %p210
      %p212 = pneg %p211
      // Predicated region
      $region9: #{tpu_custom_call.1} parent=5 // pred_check
        _
      $region10: #{tpu_custom_call.1} parent=5 // pred_check_branch
        %214 = sbr.rel (%p211) target = $region12
      $region11: #{tpu_custom_call.1} parent=5 // pred_region
        %s215 = ssub.s32 %s25, 1
        // Predicated region
        $region13: #{tpu_custom_call.1} parent=11 // pred_check
          %p216 = pneg %p119
        $region14: #{tpu_custom_call.1} parent=11 // pred_check_branch
          %218 = sbr.rel (%p216) target = $region16
        $region15: #{tpu_custom_call.1} parent=11 // pred_region
          %s220 = ssub.s32 128, 128
          %221 = vsyncadd [#allocation6], %s220
          %s222 = smul.addr %s35, 128
          %s223 = scalar_lea.hbm %s2, %s222
          %s225 = sshll.u32 [#allocation7], 4
          %s226 = int_to_ptr.vmem [resolvable:$true] %s225
          %228 = dma.hbm_to_vmem [thread:$0]  %s223, 128, %s226, [#allocation6]
        $region16: #{tpu_custom_call.1} parent=11 // pred_fallthru
          _
        // Predicated region
        $region17: #{tpu_custom_call.1} parent=11 // pred_check
          %p229 = pneg %p145
        $region18: #{tpu_custom_call.1} parent=11 // pred_check_branch
          %231 = sbr.rel (%p229) target = $region20
        $region19: #{tpu_custom_call.1} parent=11 // pred_region
          %s233 = ssub.s32 128, 128
          %234 = vsyncadd [#allocation9], %s233
          %s235 = smul.addr %s35, 128
          %s236 = scalar_lea.hbm %s3, %s235
          %s238 = sshll.u32 [#allocation8], 4
          %s239 = int_to_ptr.vmem [resolvable:$true] %s238
          %241 = dma.hbm_to_vmem [thread:$0]  %s236, 128, %s239, [#allocation9]
        $region20: #{tpu_custom_call.1} parent=11 // pred_fallthru
          _
      $region12: #{tpu_custom_call.1} parent=5 // pred_fallthru
        _
      %p242 = scmp.lt.s32.totalorder %s25, 2
      // Predicated region
      $region21: #{tpu_custom_call.1} parent=5 // pred_check
        %p243 = pneg %p242
      $region22: #{tpu_custom_call.1} parent=5 // pred_check_branch
        %245 = sbr.rel (%p243) target = $region24
      $region23: #{tpu_custom_call.1} parent=5 // pred_region
        // Predicated region
        $region25: #{tpu_custom_call.1} parent=23 // pred_check
          %p246 = pneg %p59
        $region26: #{tpu_custom_call.1} parent=23 // pred_check_branch
          %248 = sbr.rel (%p246) target = $region28
        $region27: #{tpu_custom_call.1} parent=23 // pred_region
          %s249 = sand.u32 %s49, 1
          %s250 = scalar_lea.sflag [#allocation3], %s249
          %s251 = sand.u32 %s49, 1
          %s252 = smul.addr %s251, 8
          %s253 = scalar_lea.vmem [#allocation2], %s252
          %s255 = ssub.s32 128, 128
          %256 = vsyncadd %s250, %s255
          %s257 = sadd.s32 %s33, %s32
          %s258 = smul.addr %s257, 128
          %s259 = scalar_lea.hbm %s0, %s258
          %s261 = sshll.u32 %s253, 4
          %s262 = int_to_ptr.vmem [resolvable:$true] %s261
          %264 = dma.hbm_to_vmem [thread:$0]  %s259, 128, %s262, %s250
        $region28: #{tpu_custom_call.1} parent=23 // pred_fallthru
          _
        // Predicated region
        $region29: #{tpu_custom_call.1} parent=23 // pred_check
          %p265 = pneg %p87
        $region30: #{tpu_custom_call.1} parent=23 // pred_check_branch
          %267 = sbr.rel (%p265) target = $region32
        $region31: #{tpu_custom_call.1} parent=23 // pred_region
          %s268 = sand.u32 %s25, 1
          %s269 = scalar_lea.sflag [#allocation6], %s268
          %s270 = sand.u32 %s77, 1
          %s271 = smul.addr %s270, 8
          %s272 = scalar_lea.vmem [#allocation5], %s271
          %s274 = ssub.s32 128, 128
          %275 = vsyncadd %s269, %s274
          %s276 = sadd.s32 %s33, %s32
          %s277 = smul.addr %s276, 128
          %s278 = scalar_lea.hbm %s1, %s277
          %s280 = sshll.u32 %s272, 4
          %s281 = int_to_ptr.vmem [resolvable:$true] %s280
          %283 = dma.hbm_to_vmem [thread:$0]  %s278, 128, %s281, %s269
        $region32: #{tpu_custom_call.1} parent=23 // pred_fallthru
          _
      $region24: #{tpu_custom_call.1} parent=5 // pred_fallthru
        _
      %p284 = scmp.le.s32.totalorder 1, %s25
      %p285 = scmp.lt.s32.totalorder %s25, 3
      %p286 = pnand %p284, %p285
      %p287 = pneg %p286
      // Predicated region
      $region33: #{tpu_custom_call.1} parent=5 // pred_check
        _
      $region34: #{tpu_custom_call.1} parent=5 // pred_check_branch
        %289 = sbr.rel (%p286) target = $region36
      $region35: #{tpu_custom_call.1} parent=5 // pred_region
        %s290 = ssub.s32 %s25, 1
        %s291 = sand.u32 %s52, 1
        %s292 = scalar_lea.sflag [#allocation3], %s291
        %s293 = sand.u32 %s52, 1
        %s294 = smul.addr %s293, 8
        %s295 = scalar_lea.vmem [#allocation2], %s294
        // Predicated region
        $region37: #{tpu_custom_call.1} parent=35 // pred_check
          %p296 = pneg %p65
        $region38: #{tpu_custom_call.1} parent=35 // pred_check_branch
          %298 = sbr.rel (%p296) target = $region40
        $region39: #{tpu_custom_call.1} parent=35 // pred_region
          %299 = dma.done %s292, 128
        $region40: #{tpu_custom_call.1} parent=35 // pred_fallthru
          _
        %s300 = sand.u32 %s30, 1
        %s301 = scalar_lea.sflag [#allocation6], %s300
        %s302 = sand.u32 %s80, 1
        %s303 = smul.addr %s302, 8
        %s304 = scalar_lea.vmem [#allocation5], %s303
        // Predicated region
        $region41: #{tpu_custom_call.1} parent=35 // pred_check
          %p305 = pneg %p93
        $region42: #{tpu_custom_call.1} parent=35 // pred_check_branch
          %307 = sbr.rel (%p305) target = $region44
        $region43: #{tpu_custom_call.1} parent=35 // pred_region
          %308 = dma.done %s301, 128
        $region44: #{tpu_custom_call.1} parent=35 // pred_fallthru
          _
        // Predicated region
        $region45: #{tpu_custom_call.1} parent=35 // pred_check
          %p309 = pneg %p119
        $region46: #{tpu_custom_call.1} parent=35 // pred_check_branch
          %311 = sbr.rel (%p309) target = $region48
        $region47: #{tpu_custom_call.1} parent=35 // pred_region
          %312 = dma.done [#allocation6], 128
        $region48: #{tpu_custom_call.1} parent=35 // pred_fallthru
          _
        // Predicated region
        $region49: #{tpu_custom_call.1} parent=35 // pred_check
          %p313 = pneg %p145
        $region50: #{tpu_custom_call.1} parent=35 // pred_check_branch
          %315 = sbr.rel (%p313) target = $region52
        $region51: #{tpu_custom_call.1} parent=35 // pred_region
          %316 = dma.done [#allocation9], 128
        $region52: #{tpu_custom_call.1} parent=35 // pred_fallthru
          _
        %s317 = sand.u32 %s52, 1
        %s318 = scalar_lea.sflag [#allocation3], %s317
        %s319 = sand.u32 %s52, 1
        %s320 = smul.addr %s319, 8
        %s321 = scalar_lea.vmem [#allocation2], %s320
        %p322 = pneg %p65
        %p323 = pneg %p62
        %s324 = sand.u32 %s30, 1
        %s325 = scalar_lea.sflag [#allocation6], %s324
        %s326 = sand.u32 %s80, 1
        %s327 = smul.addr %s326, 8
        %s328 = scalar_lea.vmem [#allocation5], %s327
        %p329 = pneg %p93
        %p330 = pneg %p90
        %p331 = pneg %p119
        %p332 = pneg %p116
        %p333 = pneg %p145
        %p334 = pneg %p142
        %p335 = pneg %p173
        %p336 = pneg %p170
        %s337 = sand.u32 %s160, 1
        %s338 = scalar_lea.sflag [#allocation4], %s337
        %s339 = sand.u32 %s160, 1
        %s340 = smul.addr %s339, 8
        %s341 = scalar_lea.vmem [#allocation10], %s340
        %p342 = pneg %p201
        %p343 = pneg %p198
        %s344 = sand.u32 %s188, 1
        %s345 = scalar_lea.sflag [#allocation12], %s344
        %s346 = sand.u32 %s188, 1
        %s347 = smul.addr %s346, 8
        %s348 = scalar_lea.vmem [#allocation11], %s347
        %v349 = vld [vmem:[#allocation7] sm:$0xff]
        %v350 = vld [vmem:[#allocation8] sm:$0xff]
        %v351 = vld [vmem:[%s295] sm:$0xff]
        %v352 = vadd.f32 %v351, %v349
        %v353 = vmul.f32 %v352, %v350
        %354 = vst [vmem:[%s341] sm:$0xff] %v353
        %v355 = vld [vmem:[%s304] sm:$0xff]
        %v356 = vmul.f32 %v355, %v350
        %357 = vst [vmem:[%s348] sm:$0xff] %v356
        %s358 = sand.u32 %s160, 1
        %s359 = scalar_lea.sflag [#allocation4], %s358
        %s360 = sand.u32 %s160, 1
        %s361 = smul.addr %s360, 8
        %s362 = scalar_lea.vmem [#allocation10], %s361
        %s363 = sand.u32 %s188, 1
        %s364 = scalar_lea.sflag [#allocation12], %s363
        %s365 = sand.u32 %s188, 1
        %s366 = smul.addr %s365, 8
        %s367 = scalar_lea.vmem [#allocation11], %s366
        // Predicated region
        $region53: #{tpu_custom_call.1} parent=35 // pred_check
          %p368 = pneg %p170
        $region54: #{tpu_custom_call.1} parent=35 // pred_check_branch
          %370 = sbr.rel (%p368) target = $region56
        $region55: #{tpu_custom_call.1} parent=35 // pred_region
          %s372 = ssub.s32 128, 128
          %373 = vsyncadd %s359, %s372
          %s374 = sadd.s32 %s35, %s34
          %s375 = smul.addr %s374, 128
          %s376 = scalar_lea.hbm %s4, %s375
          %s378 = sshll.u32 %s362, 4
          %s379 = int_to_ptr.vmem [resolvable:$true] %s378
          %381 = dma.vmem_to_hbm [thread:$0]  %s379, 128, %s376, %s359
        $region56: #{tpu_custom_call.1} parent=35 // pred_fallthru
          _
        // Predicated region
        $region57: #{tpu_custom_call.1} parent=35 // pred_check
          %p382 = pneg %p198
        $region58: #{tpu_custom_call.1} parent=35 // pred_check_branch
          %384 = sbr.rel (%p382) target = $region60
        $region59: #{tpu_custom_call.1} parent=35 // pred_region
          %s386 = ssub.s32 128, 128
          %387 = vsyncadd %s364, %s386
          %s388 = sadd.s32 %s35, %s34
          %s389 = smul.addr %s388, 128
          %s390 = scalar_lea.hbm %s5, %s389
          %s392 = sshll.u32 %s367, 4
          %s393 = int_to_ptr.vmem [resolvable:$true] %s392
          %395 = dma.vmem_to_hbm [thread:$0]  %s393, 128, %s390, %s364
        $region60: #{tpu_custom_call.1} parent=35 // pred_fallthru
          _
      $region36: #{tpu_custom_call.1} parent=5 // pred_fallthru
        _
      %p396 = scmp.le.s32.totalorder 2, %s25
      // Predicated region
      $region61: #{tpu_custom_call.1} parent=5 // pred_check
        %p397 = pneg %p396
      $region62: #{tpu_custom_call.1} parent=5 // pred_check_branch
        %399 = sbr.rel (%p397) target = $region64
      $region63: #{tpu_custom_call.1} parent=5 // pred_region
        %s400 = ssub.s32 %s25, 2
        // Predicated region
        $region65: #{tpu_custom_call.1} parent=63 // pred_check
          %p401 = pneg %p176
        $region66: #{tpu_custom_call.1} parent=63 // pred_check_branch
          %403 = sbr.rel (%p401) target = $region68
        $region67: #{tpu_custom_call.1} parent=63 // pred_region
          %s404 = sand.u32 %s161, 1
          %s405 = scalar_lea.sflag [#allocation4], %s404
          %s406 = sand.u32 %s161, 1
          %s407 = smul.addr %s406, 8
          %s408 = scalar_lea.vmem [#allocation10], %s407
          %409 = dma.done %s405, 128
        $region68: #{tpu_custom_call.1} parent=63 // pred_fallthru
          _
        // Predicated region
        $region69: #{tpu_custom_call.1} parent=63 // pred_check
          %p410 = pneg %p204
        $region70: #{tpu_custom_call.1} parent=63 // pred_check_branch
          %412 = sbr.rel (%p410) target = $region72
        $region71: #{tpu_custom_call.1} parent=63 // pred_region
          %s413 = sand.u32 %s189, 1
          %s414 = scalar_lea.sflag [#allocation12], %s413
          %s415 = sand.u32 %s189, 1
          %s416 = smul.addr %s415, 8
          %s417 = scalar_lea.vmem [#allocation11], %s416
          %418 = dma.done %s414, 128
        $region72: #{tpu_custom_call.1} parent=63 // pred_fallthru
          _
      $region64: #{tpu_custom_call.1} parent=5 // pred_fallthru
        _
    $region6: #{tpu_custom_call.1} parent=1 // loop_footer
      %s29 = sadd.s32 1, %s25
    $region7: #{tpu_custom_call.1} parent=1 // loop_footer_branch
      %24 = sbr.rel target = $region3
    $region8: #{tpu_custom_call.1} parent=1 // loop_exit
      _
    %419 = vsyncpa [#allocation3], 1
    %s420 = scalar_lea.sflag [#allocation3], 1
    %421 = vsyncpa %s420, 1
    %422 = vsyncpa [#allocation6], 1
    %s423 = scalar_lea.sflag [#allocation6], 1
    %424 = vsyncpa %s423, 1
    %425 = vsyncpa [#allocation9], 1
    %426 = vsyncpa [#allocation4], 1
    %s427 = scalar_lea.sflag [#allocation4], 1
    %428 = vsyncpa %s427, 1
    %429 = vsyncpa [#allocation12], 1
    %s430 = scalar_lea.sflag [#allocation12], 1
    %431 = vsyncpa %s430, 1

</llo_original>
